<compile_context>
chip_gen: v6e
topology: v6e:2x2x1
jax: 0.10.0
libtpu: 0.0.40
codegen_flags: <defaults>
</compile_context>

<pallas_src>
import functools

import jax
import jax.numpy as jnp
from jax.experimental import pallas as pl
from jax.experimental.pallas import tpu as pltpu

LANE = 128


# ------------------------------ small helpers ------------------------------ #
def _round_up(x, m):
    return (x + m - 1) // m * m


def _pow2_tile(n_pad, target):
    """Largest power-of-two multiple of 128 that is <= min(target, n_pad)."""
    t = LANE
    while t * 2 <= min(target, n_pad):
        t *= 2
    return t


def _spec(shape, index_map, buffers=None):
    """BlockSpec with an explicit pipeline buffer count; clean fallback."""
    if buffers is None:
        return pl.BlockSpec(shape, index_map)
    try:
        return pl.BlockSpec(shape, index_map, pipeline_mode=pl.Buffered(buffers))
    except Exception:                       # pipeline_mode unsupported
        return pl.BlockSpec(shape, index_map)


def _vmem_cap_bytes():
    """Generation-aware VMEM budget (~75% of physical per-TensorCore VMEM)."""
    try:
        phys = pltpu.get_tpu_info().vmem_capacity_bytes
    except Exception:
        phys = 64 << 20                     # v7x-safe conservative fallback
    return int(phys * 3 // 4)


# --------------------------------- kernels --------------------------------- #
def _transform_kernel(x_ref, w_ref, dis_ref, o_ref):
    """o = D^{-1/2} * (X @ W)  (row-scaled feature transform)."""
    xw = jnp.dot(x_ref[...], w_ref[...], preferred_element_type=jnp.float32)
    o_ref[...] = (xw * dis_ref[...]).astype(o_ref.dtype)


def _agg_kernel(a_ref, xw_ref, dis_ref, b_ref, *rest, tk, xw_resident,
                apply_relu, fuse_next):
    """acc += (A+I)_tile @ XW_tile; finalize dis*acc + b (+relu) (+@W2 *dis)."""
    if fuse_next:
        wn_ref, o_ref, acc_ref = rest
    else:
        o_ref, acc_ref = rest

    k = pl.program_id(1)

    @pl.when(k == 0)
    def _():
        acc_ref[...] = jnp.zeros_like(acc_ref)

    # int8 counts -> bf16 for the MXU (portable across v5e/v6e/v7x).
    a_bf = a_ref[...].astype(jnp.float32).astype(jnp.bfloat16)
    if xw_resident:
        start = pl.multiple_of(k * tk, LANE)
        xw_tile = xw_ref[pl.ds(start, tk), :]     # slice the VMEM-resident XW
    else:
        xw_tile = xw_ref[...]                     # k-tiled XW (v7x-safe path)
    acc_ref[...] += jnp.dot(a_bf, xw_tile, preferred_element_type=jnp.float32)

    @pl.when(k == pl.num_programs(1) - 1)
    def _():
        dis = dis_ref[...]                        # [tm, 1] D^{-1/2} rows
        h = dis * acc_ref[...] + b_ref[...]       # left D^{-1/2} + bias
        if apply_relu:
            h = jnp.maximum(h, 0.0)
        if fuse_next:
            # Fuse next layer's transform and pre-scale for its aggregation.
            h = jnp.dot(h.astype(wn_ref.dtype), wn_ref[...],
                        preferred_element_type=jnp.float32)
            h = h * dis
        o_ref[...] = h.astype(o_ref.dtype)


def _fused_small_kernel(a_ref, x_ref, w1_ref, b1_ref, w2_ref, b2_ref, dis_ref,
                        o_ref):
    """Whole 2-layer GCN in one VMEM-resident shot (toy/small graphs)."""
    bf16 = jnp.bfloat16
    a = a_ref[...].astype(jnp.float32).astype(bf16)
    dis = dis_ref[...]
    xw1 = jnp.dot(x_ref[...], w1_ref[...], preferred_element_type=jnp.float32)
    xw1 = (xw1 * dis).astype(bf16)
    agg1 = jnp.dot(a, xw1, preferred_element_type=jnp.float32)
    h = jnp.maximum(dis * agg1 + b1_ref[...], 0.0)
    hw2 = jnp.dot(h.astype(bf16), w2_ref[...], preferred_element_type=jnp.float32)
    hw2 = (hw2 * dis).astype(bf16)
    agg2 = jnp.dot(a, hw2, preferred_element_type=jnp.float32)
    o_ref[...] = (dis * agg2 + b2_ref[...]).astype(o_ref.dtype)


# -------------------------------- wrappers ---------------------------------- #
def gcn_transform(x, w, dis, *, tm):
    n_pad, f_in = x.shape
    f_out = w.shape[1]
    return pl.pallas_call(
        _transform_kernel,
        out_shape=jax.ShapeDtypeStruct((n_pad, f_out), jnp.bfloat16),
        grid=(n_pad // tm,),
        in_specs=[
            pl.BlockSpec((tm, f_in), lambda i: (i, 0)),
            _spec((f_in, f_out), lambda i: (0, 0), buffers=1),   # W resident
            pl.BlockSpec((tm, 1), lambda i: (i, 0)),
        ],
        out_specs=pl.BlockSpec((tm, f_out), lambda i: (i, 0)),
        compiler_params=pltpu.CompilerParams(
            dimension_semantics=("parallel",)),
    )(x, w, dis)


def gcn_aggregate(a_i8, xw, dis, b, w_next, *, tm, tk, apply_relu, fuse_next,
                  out_dtype=jnp.bfloat16):
    """out = [relu](D^{-1/2}((A+I)@XW) + b) [@ W_next * D^{-1/2}]."""
    n_pad = a_i8.shape[0]
    f_mid = xw.shape[1]
    f_out = w_next.shape[1] if fuse_next else f_mid
    out_itemsize = jnp.dtype(out_dtype).itemsize
    cap = _vmem_cap_bytes()

    def vmem_est(resident, a_bufs):
        e = a_bufs * tm * tk                      # int8 A tiles
        e += tm * tk * 6                          # in-kernel f32 + bf16 A temps
        e += (n_pad * f_mid * 2) if resident else (2 * tk * f_mid * 2)
        e += f_mid * 4 + (f_mid * f_out * 2 if fuse_next else 0)
        e += tm * f_mid * 4                       # f32 accumulator
        e += 2 * tm * f_out * out_itemsize        # out tiles
        e += 2 * tm * 4                           # dis tiles
        return e + (2 << 20)                      # headroom

    a_bufs = 3                                    # deeper buffering on streamed A
    xw_resident = (n_pad * f_mid * 2) <= min(20 << 20, cap // 2)
    if xw_resident and vmem_est(True, a_bufs) > cap:
        xw_resident = False                       # v7x 64 MiB guard: k-tile XW
    vmem_limit = int(min(max(vmem_est(xw_resident, a_bufs), 32 << 20), cap))

    in_specs = [
        _spec((tm, tk), lambda i, k: (i, k), buffers=a_bufs),        # streamed A
        (_spec((n_pad, f_mid), lambda i, k: (0, 0), buffers=1)
         if xw_resident else
         pl.BlockSpec((tk, f_mid), lambda i, k: (k, 0))),            # XW
        pl.BlockSpec((tm, 1), lambda i, k: (i, 0)),                  # dis rows
        _spec((1, f_mid), lambda i, k: (0, 0), buffers=1),           # bias
    ]
    args = [a_i8, xw, dis, b]
    if fuse_next:
        in_specs.append(_spec(w_next.shape, lambda i, k: (0, 0), buffers=1))
        args.append(w_next)

    flops = 2 * n_pad * n_pad * f_mid
    if fuse_next:
        flops += 2 * n_pad * f_mid * f_out
    bytes_accessed = int(
        a_i8.size + xw.size * 2 + b.size * 4 + dis.size * 4
        + (w_next.size * 2 if fuse_next else 0)
        + n_pad * f_out * out_itemsize)

    kernel = functools.partial(_agg_kernel, tk=tk, xw_resident=xw_resident,
                               apply_relu=apply_relu, fuse_next=fuse_next)
    return pl.pallas_call(
        kernel,
        out_shape=jax.ShapeDtypeStruct((n_pad, f_out), out_dtype),
        grid=(n_pad // tm, n_pad // tk),
        in_specs=in_specs,
        out_specs=pl.BlockSpec((tm, f_out), lambda i, k: (i, 0)),
        scratch_shapes=[pltpu.VMEM((tm, f_mid), jnp.float32)],
        compiler_params=pltpu.CompilerParams(
            dimension_semantics=("parallel", "arbitrary"),
            vmem_limit_bytes=vmem_limit),
        cost_estimate=pl.CostEstimate(
            flops=flops, transcendentals=0, bytes_accessed=bytes_accessed),
    )(*args)


def gcn_fused_small(a_i8, x, w1, b1, w2, b2, dis, *, vmem_limit,
                    out_dtype=jnp.bfloat16):
    n_pad = a_i8.shape[0]
    cls_p = w2.shape[1]

    def full(arr):
        nd = arr.ndim
        return pl.BlockSpec(arr.shape, lambda i, _nd=nd: (0,) * _nd)

    return pl.pallas_call(
        _fused_small_kernel,
        out_shape=jax.ShapeDtypeStruct((n_pad, cls_p), out_dtype),
        grid=(1,),
        in_specs=[full(a_i8), full(x), full(w1), full(b1), full(w2), full(b2),
                  full(dis)],
        out_specs=pl.BlockSpec((n_pad, cls_p), lambda i: (0, 0)),
        compiler_params=pltpu.CompilerParams(vmem_limit_bytes=vmem_limit),
    )(a_i8, x, w1, b1, w2, b2, dis)


# -------------------------------- JAX glue ---------------------------------- #
def build_adjacency_and_scale(edge_index, num_nodes):
    """Integer (A+I) multiplicity counts (PyG edge semantics) and D^{-1/2}."""
    src, dst = edge_index[0], edge_index[1]
    # add_remaining_self_loops: drop existing self-loops, add one weight-1 loop.
    w = jnp.where(src != dst, 1, 0).astype(jnp.int32)
    a = jnp.zeros((num_nodes, num_nodes), jnp.int32).at[dst, src].add(w)
    a = a + jnp.eye(num_nodes, dtype=jnp.int32)
    deg = jnp.sum(a, axis=1).astype(jnp.float32)
    dis = jnp.where(deg > 0, jax.lax.rsqrt(deg), 0.0)
    # TODO(synk): int8 saturates if one (src,dst) pair repeats >127 times; fall
    #             back to bf16/f32 A for such multigraphs.
    a_i8 = jnp.clip(a, 0, 127).astype(jnp.int8)
    return a_i8, dis


def gcn_forward(x, edge_index, params, *, force_tiled=False):
    n, f_in = x.shape
    hid = params["w1"].shape[1]
    ncls = params["w2"].shape[1]

    # TODO(synk): dense O(N^2) adjacency is plain-JAX glue; real fix is a CSR
    #             scatter/gather kernel via PrefetchScalarGridSpec.
    a_i8, dis = build_adjacency_and_scale(edge_index, n)

    # Lane-dense padding; pick large pow2 tiles and round N up to the tile so
    # the tile never collapses to 128 for awkward N.
    f_in_p = _round_up(f_in, LANE)
    hid_p = _round_up(hid, LANE)
    cls_p = _round_up(ncls, LANE)
    n_pad0 = _round_up(n, LANE)
    tm = _pow2_tile(n_pad0, 512)
    tk = _pow2_tile(n_pad0, 1024)
    n_pad = _round_up(n_pad0, max(tm, tk))

    bf16 = jnp.bfloat16
    a_p = jnp.zeros((n_pad, n_pad), jnp.int8).at[:n, :n].set(a_i8)
    dis_p = jnp.zeros((n_pad, 1), jnp.float32).at[:n, 0].set(dis)
    x_p = jnp.zeros((n_pad, f_in_p), bf16).at[:n, :f_in].set(x.astype(bf16))
    w1_p = jnp.zeros((f_in_p, hid_p), bf16).at[:f_in, :hid].set(
        params["w1"].astype(bf16))
    b1_p = jnp.zeros((1, hid_p), jnp.float32).at[0, :hid].set(params["b1"])
    w2_p = jnp.zeros((hid_p, cls_p), bf16).at[:hid, :ncls].set(
        params["w2"].astype(bf16))
    b2_p = jnp.zeros((1, cls_p), jnp.float32).at[0, :ncls].set(params["b2"])

    cap = _vmem_cap_bytes()
    small_est = (7 * n_pad * n_pad                       # A int8 + f32 + bf16 temps
                 + n_pad * (2 * f_in_p + 10 * hid_p + 10 * cls_p)
                 + 2 * f_in_p * hid_p + 2 * hid_p * cls_p + (2 << 20))

    if (not force_tiled) and small_est <= cap // 2:
        # Everything fits in VMEM: single fused call (no HBM round trips,
        # one dispatch instead of three).
        vmem_limit = int(min(max(small_est, 32 << 20), cap))
        out_p = gcn_fused_small(a_p, x_p, w1_p, b1_p, w2_p, b2_p, dis_p,
                                vmem_limit=vmem_limit)
    else:
        # Layer 1 feature transform, pre-scaled by D^{-1/2} (hoisted).
        xw1 = gcn_transform(x_p, w1_p, dis_p, tm=tm)       # [n_pad, hid_p] bf16
        # Layer 1 aggregation + bias + relu, fused with layer-2 transform,
        # output pre-scaled for layer 2's aggregation.
        hw2 = gcn_aggregate(a_p, xw1, dis_p, b1_p, w2_p, tm=tm, tk=tk,
                            apply_relu=True, fuse_next=True)  # [n_pad, cls_p] bf16
        # Layer 2 aggregation + bias (bf16 writeback; cast outside).
        out_p = gcn_aggregate(a_p, hw2, dis_p, b2_p, None, tm=tm, tk=tk,
                              apply_relu=False, fuse_next=False)

    return out_p[:n, :ncls].astype(jnp.float32)


# ---------------------------------- main ------------------------------------ #
if __name__ == "__main__":
    num_nodes = 64
    num_features = 16
    hidden_size = 32
    num_classes = 8
    num_edges = 256

    key = jax.random.PRNGKey(0)
    k_x, k_e, k_w1, k_w2 = jax.random.split(key, 4)

    x = jax.random.normal(k_x, (num_nodes, num_features), dtype=jnp.float32)
    edge_index = jax.random.randint(
        k_e, (2, num_edges), 0, num_nodes, dtype=jnp.int32)

    def glorot(k, fan_in, fan_out):
        limit = (6.0 / (fan_in + fan_out)) ** 0.5
        return jax.random.uniform(
            k, (fan_in, fan_out), jnp.float32, -limit, limit)

    params = {
        "w1": glorot(k_w1, num_features, hidden_size),
        "b1": jnp.zeros((hidden_size,), jnp.float32),
        "w2": glorot(k_w2, hidden_size, num_classes),
        "b2": jnp.zeros((num_classes,), jnp.float32),
    }

    # Small-graph fused path (what this config uses by default).
    out = jax.jit(gcn_forward)(x, edge_index, params)
    jax.block_until_ready(out)
    assert out.shape == (num_nodes, num_classes)
    assert out.dtype == jnp.float32
    assert bool(jnp.all(jnp.isfinite(out)))

    # Also exercise the tiled (large-graph) path and check it agrees.
    out_tiled = jax.jit(
        functools.partial(gcn_forward, force_tiled=True))(x, edge_index, params)
    jax.block_until_ready(out_tiled)
    assert out_tiled.shape == (num_nodes, num_classes)
    assert bool(jnp.all(jnp.isfinite(out_tiled)))
    assert bool(jnp.allclose(out, out_tiled, atol=5e-2, rtol=5e-2))

    print("KERNEL_OK")
</pallas_src>

<mosaic_0001>
module attributes {stable_mosaic.version = 11 : i64} {
  func.func private @main(%arg0: i32) attributes {dimension_semantics = [#tpu.dimension_semantics<core_parallel>], iteration_bounds = array<i64: 2>, tpu.core_type = #tpu.core_type<sc_scalar_subcore>, window_params = []} {
    return
  }
}

module attributes {stable_mosaic.version = 11 : i64} {
  func.func private @main(%arg0: i32) attributes {dimension_semantics = [#tpu.dimension_semantics<core_parallel>], iteration_bounds = array<i64: 2>, tpu.core_type = #tpu.core_type<sc_scalar_subcore>, window_params = []} {
    return
  }
}

module attributes {stable_mosaic.version = 11 : i64} {
  func.func @_fused_small_kernel(%arg0: i32, %arg1: memref<128x128xi8, #tpu.memory_space<vmem>>, %arg2: memref<128x128xbf16, #tpu.memory_space<vmem>>, %arg3: memref<128x128xbf16, #tpu.memory_space<vmem>>, %arg4: memref<1x128xf32, #tpu.memory_space<vmem>>, %arg5: memref<128x128xbf16, #tpu.memory_space<vmem>>, %arg6: memref<1x128xf32, #tpu.memory_space<vmem>>, %arg7: memref<128x1xf32, #tpu.memory_space<vmem>>, %arg8: memref<128x128xbf16, #tpu.memory_space<vmem>>) attributes {dimension_semantics = [#tpu.dimension_semantics<arbitrary>], iteration_bounds = array<i64: 1>, scalar_prefetch = 0 : i64, scratch_operands = 0 : i64, tpu.core_type = #tpu.core_type<tc>, window_params = [{pipeline_mode = #tpu.pipeline_mode<synchronous>, transform_indices = @transform_0, window_bounds = array<i64: 128, 128>}, {pipeline_mode = #tpu.pipeline_mode<synchronous>, transform_indices = @transform_1, window_bounds = array<i64: 128, 128>}, {pipeline_mode = #tpu.pipeline_mode<synchronous>, transform_indices = @transform_2, window_bounds = array<i64: 128, 128>}, {pipeline_mode = #tpu.pipeline_mode<synchronous>, transform_indices = @transform_3, window_bounds = array<i64: 1, 128>}, {pipeline_mode = #tpu.pipeline_mode<synchronous>, transform_indices = @transform_4, window_bounds = array<i64: 128, 128>}, {pipeline_mode = #tpu.pipeline_mode<synchronous>, transform_indices = @transform_5, window_bounds = array<i64: 1, 128>}, {pipeline_mode = #tpu.pipeline_mode<synchronous>, transform_indices = @transform_6, window_bounds = array<i64: 128, 1>}, {pipeline_mode = #tpu.pipeline_mode<synchronous>, transform_indices = @transform_7, window_bounds = array<i64: 128, 128>}]} {
    %c0 = arith.constant 0 : index
    %c0_0 = arith.constant 0 : index
    %0 = vector.load %arg1[%c0, %c0_0] : memref<128x128xi8, #tpu.memory_space<vmem>>, vector<128x128xi8>
    %1 = arith.sitofp %0 : vector<128x128xi8> to vector<128x128xf32>
    %2 = arith.truncf %1 : vector<128x128xf32> to vector<128x128xbf16>
    %c0_1 = arith.constant 0 : index
    %c0_2 = arith.constant 0 : index
    %3 = vector.load %arg7[%c0_1, %c0_2] : memref<128x1xf32, #tpu.memory_space<vmem>>, vector<128x1xf32>
    %c0_3 = arith.constant 0 : index
    %c0_4 = arith.constant 0 : index
    %4 = vector.load %arg2[%c0_3, %c0_4] : memref<128x128xbf16, #tpu.memory_space<vmem>>, vector<128x128xbf16>
    %c0_5 = arith.constant 0 : index
    %c0_6 = arith.constant 0 : index
    %5 = vector.load %arg3[%c0_5, %c0_6] : memref<128x128xbf16, #tpu.memory_space<vmem>>, vector<128x128xbf16>
    %cst = arith.constant dense<0.000000e+00> : vector<128x128xf32>
    %6 = tpu.matmul %4, %5, %cst {dimension_numbers = #tpu.dot_dimension_numbers<[1], [0], [0], [1], [0, 0, 1, 1], [], []>} : vector<128x128xbf16>, vector<128x128xbf16>, vector<128x128xf32> -> vector<128x128xf32>
    %7 = vector.broadcast %3 : vector<128x1xf32> to vector<128x128xf32>
    %8 = arith.mulf %6, %7 : vector<128x128xf32>
    %9 = arith.truncf %8 : vector<128x128xf32> to vector<128x128xbf16>
    %cst_7 = arith.constant dense<0.000000e+00> : vector<128x128xf32>
    %10 = tpu.matmul %2, %9, %cst_7 {dimension_numbers = #tpu.dot_dimension_numbers<[1], [0], [0], [1], [0, 0, 1, 1], [], []>} : vector<128x128xbf16>, vector<128x128xbf16>, vector<128x128xf32> -> vector<128x128xf32>
    %11 = vector.broadcast %3 : vector<128x1xf32> to vector<128x128xf32>
    %12 = arith.mulf %11, %10 : vector<128x128xf32>
    %c0_8 = arith.constant 0 : index
    %c0_9 = arith.constant 0 : index
    %13 = vector.load %arg4[%c0_8, %c0_9] : memref<1x128xf32, #tpu.memory_space<vmem>>, vector<1x128xf32>
    %14 = vector.broadcast %13 : vector<1x128xf32> to vector<128x128xf32>
    %15 = arith.addf %12, %14 : vector<128x128xf32>
    %cst_10 = arith.constant 0.000000e+00 : f32
    %16 = vector.broadcast %cst_10 : f32 to vector<128x128xf32>
    %17 = arith.maximumf %15, %16 : vector<128x128xf32>
    %18 = arith.truncf %17 : vector<128x128xf32> to vector<128x128xbf16>
    %c0_11 = arith.constant 0 : index
    %c0_12 = arith.constant 0 : index
    %19 = vector.load %arg5[%c0_11, %c0_12] : memref<128x128xbf16, #tpu.memory_space<vmem>>, vector<128x128xbf16>
    %cst_13 = arith.constant dense<0.000000e+00> : vector<128x128xf32>
    %20 = tpu.matmul %18, %19, %cst_13 {dimension_numbers = #tpu.dot_dimension_numbers<[1], [0], [0], [1], [0, 0, 1, 1], [], []>} : vector<128x128xbf16>, vector<128x128xbf16>, vector<128x128xf32> -> vector<128x128xf32>
    %21 = vector.broadcast %3 : vector<128x1xf32> to vector<128x128xf32>
    %22 = arith.mulf %20, %21 : vector<128x128xf32>
    %23 = arith.truncf %22 : vector<128x128xf32> to vector<128x128xbf16>
    %cst_14 = arith.constant dense<0.000000e+00> : vector<128x128xf32>
    %24 = tpu.matmul %2, %23, %cst_14 {dimension_numbers = #tpu.dot_dimension_numbers<[1], [0], [0], [1], [0, 0, 1, 1], [], []>} : vector<128x128xbf16>, vector<128x128xbf16>, vector<128x128xf32> -> vector<128x128xf32>
    %25 = vector.broadcast %3 : vector<128x1xf32> to vector<128x128xf32>
    %26 = arith.mulf %25, %24 : vector<128x128xf32>
    %c0_15 = arith.constant 0 : index
    %c0_16 = arith.constant 0 : index
    %27 = vector.load %arg6[%c0_15, %c0_16] : memref<1x128xf32, #tpu.memory_space<vmem>>, vector<1x128xf32>
    %28 = vector.broadcast %27 : vector<1x128xf32> to vector<128x128xf32>
    %29 = arith.addf %26, %28 : vector<128x128xf32>
    %30 = arith.truncf %29 : vector<128x128xf32> to vector<128x128xbf16>
    %c0_17 = arith.constant 0 : index
    %c0_18 = arith.constant 0 : index
    %31 = vector.load %arg8[%c0_17, %c0_18] : memref<128x128xbf16, #tpu.memory_space<vmem>>, vector<128x128xbf16>
    tpu.vector_store %arg8[%c0_17, %c0_18], %30 {strides = array<i32>} : memref<128x128xbf16, #tpu.memory_space<vmem>>, vector<128x128xbf16>,
    return
  }
  func.func @transform_0(%arg0: i32) -> (i32, i32) {
    %c0_i32 = arith.constant 0 : i32
    %c0_i32_0 = arith.constant 0 : i32
    %c0_i32_1 = arith.constant 0 : i32
    return %c0_i32, %c0_i32_0 : i32, i32
  }
  func.func @transform_1(%arg0: i32) -> (i32, i32) {
    %c0_i32 = arith.constant 0 : i32
    %c0_i32_0 = arith.constant 0 : i32
    %c0_i32_1 = arith.constant 0 : i32
    return %c0_i32, %c0_i32_0 : i32, i32
  }
  func.func @transform_2(%arg0: i32) -> (i32, i32) {
    %c0_i32 = arith.constant 0 : i32
    %c0_i32_0 = arith.constant 0 : i32
    %c0_i32_1 = arith.constant 0 : i32
    return %c0_i32, %c0_i32_0 : i32, i32
  }
  func.func @transform_3(%arg0: i32) -> (i32, i32) {
    %c0_i32 = arith.constant 0 : i32
    %c0_i32_0 = arith.constant 0 : i32
    %c0_i32_1 = arith.constant 0 : i32
    return %c0_i32, %c0_i32_0 : i32, i32
  }
  func.func @transform_4(%arg0: i32) -> (i32, i32) {
    %c0_i32 = arith.constant 0 : i32
    %c0_i32_0 = arith.constant 0 : i32
    %c0_i32_1 = arith.constant 0 : i32
    return %c0_i32, %c0_i32_0 : i32, i32
  }
  func.func @transform_5(%arg0: i32) -> (i32, i32) {
    %c0_i32 = arith.constant 0 : i32
    %c0_i32_0 = arith.constant 0 : i32
    %c0_i32_1 = arith.constant 0 : i32
    return %c0_i32, %c0_i32_0 : i32, i32
  }
  func.func @transform_6(%arg0: i32) -> (i32, i32) {
    %c0_i32 = arith.constant 0 : i32
    %c0_i32_0 = arith.constant 0 : i32
    %c0_i32_1 = arith.constant 0 : i32
    return %c0_i32, %c0_i32_0 : i32, i32
  }
  func.func @transform_7(%arg0: i32) -> (i32, i32) {
    %c0_i32 = arith.constant 0 : i32
    %c0_i32_0 = arith.constant 0 : i32
    %c0_i32_1 = arith.constant 0 : i32
    return %c0_i32, %c0_i32_0 : i32, i32
  }
}

</mosaic_0001>

<llo_original>
// kernel: gcn_forward.1
$region0: #{gcn_forward.1}
  #allocation0 [shape = 'u32[]', space=smem, size = 0x4, offset = 0x4, fixed_abs, tag = 'smem constant byte address 0x4 - core index']
  #allocation1 [shape = 'u32[144,128]{1,0:T(1,128)}', space=vmem, size = 0x12000, scoped, tag = 'internal scratch']
  %s0 = inlined_call_operand.vmem [shape: s8[128,128], index: 0, kind: input, shape index: {}]
  %s1 = inlined_call_operand.vmem [shape: bf16[128,128], index: 1, kind: input, shape index: {}]
  %s2 = inlined_call_operand.vmem [shape: bf16[128,128], index: 2, kind: input, shape index: {}]
  %s3 = inlined_call_operand.vmem [shape: f32[1,128], index: 3, kind: input, shape index: {}]
  %s4 = inlined_call_operand.vmem [shape: bf16[128,128], index: 4, kind: input, shape index: {}]
  %s5 = inlined_call_operand.vmem [shape: f32[1,128], index: 5, kind: input, shape index: {}]
  %s6 = inlined_call_operand.vmem [shape: f32[128,1], index: 6, kind: input, shape index: {}]
  %s7 = inlined_call_operand.vmem [shape: bf16[128,128], index: 7, kind: output, shape index: {}]
  %s8 = sld [smem:[#allocation0]]
  $region38: #{gcn_forward.1} parent=0
    _
  %s10 = ssub.s32 1, %s8
  %s11 = scalar_select 0, %s10, %s8
  // Predicated region
  $region2: #{gcn_forward.1} parent=0 // pred_check
    _
  $region3: #{gcn_forward.1} parent=0 // pred_check_branch
    %13 = sbr.rel (0) target = $region5
  $region4: #{gcn_forward.1} parent=0 // pred_region
    _
  $region5: #{gcn_forward.1} parent=0 // pred_fallthru
    _
  // Predicated region
  $region6: #{gcn_forward.1} parent=0 // pred_check
    _
  $region7: #{gcn_forward.1} parent=0 // pred_check_branch
    %15 = sbr.rel (0) target = $region9
  $region8: #{gcn_forward.1} parent=0 // pred_region
    _
  $region9: #{gcn_forward.1} parent=0 // pred_fallthru
    _
  // Predicated region
  $region10: #{gcn_forward.1} parent=0 // pred_check
    _
  $region11: #{gcn_forward.1} parent=0 // pred_check_branch
    %17 = sbr.rel (0) target = $region13
  $region12: #{gcn_forward.1} parent=0 // pred_region
    _
  $region13: #{gcn_forward.1} parent=0 // pred_fallthru
    _
  // Predicated region
  $region14: #{gcn_forward.1} parent=0 // pred_check
    _
  $region15: #{gcn_forward.1} parent=0 // pred_check_branch
    %19 = sbr.rel (0) target = $region17
  $region16: #{gcn_forward.1} parent=0 // pred_region
    _
  $region17: #{gcn_forward.1} parent=0 // pred_fallthru
    _
  // Predicated region
  $region18: #{gcn_forward.1} parent=0 // pred_check
    _
  $region19: #{gcn_forward.1} parent=0 // pred_check_branch
    %21 = sbr.rel (0) target = $region21
  $region20: #{gcn_forward.1} parent=0 // pred_region
    _
  $region21: #{gcn_forward.1} parent=0 // pred_fallthru
    _
  // Predicated region
  $region22: #{gcn_forward.1} parent=0 // pred_check
    _
  $region23: #{gcn_forward.1} parent=0 // pred_check_branch
    %23 = sbr.rel (0) target = $region25
  $region24: #{gcn_forward.1} parent=0 // pred_region
    _
  $region25: #{gcn_forward.1} parent=0 // pred_fallthru
    _
  // Predicated region
  $region26: #{gcn_forward.1} parent=0 // pred_check
    _
  $region27: #{gcn_forward.1} parent=0 // pred_check_branch
    %25 = sbr.rel (0) target = $region29
  $region28: #{gcn_forward.1} parent=0 // pred_region
    _
  $region29: #{gcn_forward.1} parent=0 // pred_fallthru
    _
  %v27 = vld [vmem:[%s0] sm:$0xff]
  %v28 = vld [vmem:[%s0 + $0x8] sm:$0xff]
  %v29 = vld [vmem:[%s0 + $0x10] sm:$0xff]
  %v30 = vld [vmem:[%s0 + $0x18] sm:$0xff]
  %v31 = vunpack.c.l.s8.bf16 %v27
  %v32 = vunpack.c.h.s8.bf16 %v27
  %v33 = vunpack.c.l.s8.bf16 %v28
  %v34 = vunpack.c.h.s8.bf16 %v28
  %v35 = vunpack.c.l.s8.bf16 %v29
  %v36 = vunpack.c.h.s8.bf16 %v29
  %v37 = vunpack.c.l.s8.bf16 %v30
  %v38 = vunpack.c.h.s8.bf16 %v30
  %v39 = vld [vmem:[%s6] sm:$0xff]
  %v40 = vld [vmem:[%s6 + $0x8] sm:$0xff]
  %v41 = vld [vmem:[%s6 + $0x10] sm:$0xff]
  %v42 = vld [vmem:[%s6 + $0x18] sm:$0xff]
  %v43 = vld [vmem:[%s6 + $0x20] sm:$0xff]
  %v44 = vld [vmem:[%s6 + $0x28] sm:$0xff]
  %v45 = vld [vmem:[%s6 + $0x30] sm:$0xff]
  %v46 = vld [vmem:[%s6 + $0x38] sm:$0xff]
  %v47 = vld [vmem:[%s6 + $0x40] sm:$0xff]
  %v48 = vld [vmem:[%s6 + $0x48] sm:$0xff]
  %v49 = vld [vmem:[%s6 + $0x50] sm:$0xff]
  %v50 = vld [vmem:[%s6 + $0x58] sm:$0xff]
  %v51 = vld [vmem:[%s6 + $0x60] sm:$0xff]
  %v52 = vld [vmem:[%s6 + $0x68] sm:$0xff]
  %v53 = vld [vmem:[%s6 + $0x70] sm:$0xff]
  %v54 = vld [vmem:[%s6 + $0x78] sm:$0xff]
  %v55 = vld [vmem:[%s1] sm:$0xf]
  %v56 = vld [vmem:[%s1 + $0x4] sm:$0xf]
  %v57 = vld [vmem:[%s1 + $0x8] sm:$0xf]
  %v58 = vld [vmem:[%s1 + $0xc] sm:$0xf]
  %v59 = vld [vmem:[%s1 + $0x10] sm:$0xf]
  %v60 = vld [vmem:[%s1 + $0x14] sm:$0xf]
  %v61 = vld [vmem:[%s1 + $0x18] sm:$0xf]
  %v62 = vld [vmem:[%s1 + $0x1c] sm:$0xf]
  %v63 = vld [vmem:[%s1 + $0x20] sm:$0xf]
  %v64 = vld [vmem:[%s1 + $0x24] sm:$0xf]
  %v65 = vld [vmem:[%s1 + $0x28] sm:$0xf]
  %v66 = vld [vmem:[%s1 + $0x2c] sm:$0xf]
  %v67 = vld [vmem:[%s1 + $0x30] sm:$0xf]
  %v68 = vld [vmem:[%s1 + $0x34] sm:$0xf]
  %v69 = vld [vmem:[%s1 + $0x38] sm:$0xf]
  %v70 = vld [vmem:[%s1 + $0x3c] sm:$0xf]
  %v71 = vld [vmem:[%s2] sm:$0xf]
  %v72 = vld [vmem:[%s2 + $0x4] sm:$0xf]
  %v73 = vld [vmem:[%s2 + $0x8] sm:$0xf]
  %v74 = vld [vmem:[%s2 + $0xc] sm:$0xf]
  %v75 = vld [vmem:[%s2 + $0x10] sm:$0xf]
  %v76 = vld [vmem:[%s2 + $0x14] sm:$0xf]
  %v77 = vld [vmem:[%s2 + $0x18] sm:$0xf]
  %v78 = vld [vmem:[%s2 + $0x1c] sm:$0xf]
  %v79 = vld [vmem:[%s2 + $0x20] sm:$0xf]
  %v80 = vld [vmem:[%s2 + $0x24] sm:$0xf]
  %v81 = vld [vmem:[%s2 + $0x28] sm:$0xf]
  %v82 = vld [vmem:[%s2 + $0x2c] sm:$0xf]
  %v83 = vld [vmem:[%s2 + $0x30] sm:$0xf]
  %v84 = vld [vmem:[%s2 + $0x34] sm:$0xf]
  %v85 = vld [vmem:[%s2 + $0x38] sm:$0xf]
  %v86 = vld [vmem:[%s2 + $0x3c] sm:$0xf]
  %v103 = vunpack.c.l.b16 %v55
  %v104 = vunpack.c.l.b16 %v56
  %v105 = vunpack.c.l.b16 %v57
  %v106 = vunpack.c.l.b16 %v58
  %v107 = vunpack.c.l.b16 %v59
  %v108 = vunpack.c.l.b16 %v60
  %v109 = vunpack.c.l.b16 %v61
  %v110 = vunpack.c.l.b16 %v62
  %v111 = vunpack.c.l.b16 %v63
  %v112 = vunpack.c.l.b16 %v64
  %v113 = vunpack.c.l.b16 %v65
  %v114 = vunpack.c.l.b16 %v66
  %v115 = vunpack.c.l.b16 %v67
  %v116 = vunpack.c.l.b16 %v68
  %v117 = vunpack.c.l.b16 %v69
  %v118 = vunpack.c.l.b16 %v70
  %v119 = vpack.c.b16 %v104, %v103
  %v120 = vpack.c.b16 %v106, %v105
  %v121 = vpack.c.b16 %v108, %v107
  %v122 = vpack.c.b16 %v110, %v109
  %v123 = vpack.c.b16 %v112, %v111
  %v124 = vpack.c.b16 %v114, %v113
  %v125 = vpack.c.b16 %v116, %v115
  %v126 = vpack.c.b16 %v118, %v117
  %v151 = vunpack.c.l.b16 %v71
  %v152 = vunpack.c.l.b16 %v72
  %v153 = vunpack.c.l.b16 %v73
  %v154 = vunpack.c.l.b16 %v74
  %v155 = vunpack.c.l.b16 %v75
  %v156 = vunpack.c.l.b16 %v76
  %v157 = vunpack.c.l.b16 %v77
  %v158 = vunpack.c.l.b16 %v78
  %v159 = vunpack.c.l.b16 %v79
  %v160 = vunpack.c.l.b16 %v80
  %v161 = vunpack.c.l.b16 %v81
  %v162 = vunpack.c.l.b16 %v82
  %v163 = vunpack.c.l.b16 %v83
  %v164 = vunpack.c.l.b16 %v84
  %v165 = vunpack.c.l.b16 %v85
  %v166 = vunpack.c.l.b16 %v86
  %v167 = vpack.c.b16 %v152, %v151
  %v168 = vpack.c.b16 %v154, %v153
  %v169 = vpack.c.b16 %v156, %v155
  %v170 = vpack.c.b16 %v158, %v157
  %v171 = vpack.c.b16 %v160, %v159
  %v172 = vpack.c.b16 %v162, %v161
  %v173 = vpack.c.b16 %v164, %v163
  %v174 = vpack.c.b16 %v166, %v165
  %183 = vmatprep.subr.bf16.mxu0 0
  %184 = vmatpush1.bf16.msra.mxu0 %v174
  %185 = vmatprep.subr.bf16.mxu0 0
  %186 = vmatpush1.bf16.msra.mxu0 %v173
  %187 = vmatprep.subr.bf16.mxu0 0
  %188 = vmatpush1.bf16.msra.mxu0 %v172
  %189 = vmatprep.subr.bf16.mxu0 0
  %190 = vmatpush1.bf16.msra.mxu0 %v171
  %191 = vmatprep.subr.bf16.mxu0 0
  %192 = vmatpush1.bf16.msra.mxu0 %v170
  %193 = vmatprep.subr.bf16.mxu0 0
  %194 = vmatpush1.bf16.msra.mxu0 %v169
  %195 = vmatprep.subr.bf16.mxu0 0
  %196 = vmatpush1.bf16.msra.mxu0 %v168
  %197 = vmatprep.subr.bf16.mxu0 0
  %198 = vmatpush1.bf16.msra.mxu0 %v167
  %199 = vmatprep.subr.bf16.mxu0 0
  %200 = vmatpush2.bf16.msra.mxu0 0
  %201 = vmatprep.subr.bf16.mxu0 0
  %202 = vmatpush2.bf16.msra.mxu0 0
  %203 = vmatprep.subr.bf16.mxu0 0
  %204 = vmatpush2.bf16.msra.mxu0 0
  %205 = vmatprep.subr.bf16.mxu0 0
  %206 = vmatpush2.bf16.msra.mxu0 0
  %207 = vmatprep.subr.bf16.mxu0 0
  %208 = vmatpush2.bf16.msra.mxu0 0
  %209 = vmatprep.subr.bf16.mxu0 0
  %210 = vmatpush2.bf16.msra.mxu0 0
  %211 = vmatprep.subr.bf16.mxu0 0
  %212 = vmatpush2.bf16.msra.mxu0 0
  %213 = vmatprep.subr.bf16.mxu0 0
  %214 = vmatpush2.bf16.msra.mxu0 0
  %215 = vmatprep.mubr.bf16.mxu0 0
  %216 = vmatmul.mubr.bf16.gmra.mxu0 %v119
  %v217 = vpop.f32.mrf.mxu0
  %v218 = vadd.f32 0.0, %v217
  %v219 = vpop.f32.mrf.mxu0
  %v220 = vpop.f32.mrf.mxu0
  %v221 = vadd.f32 0.0, %v220
  %v222 = vpop.f32.mrf.mxu0
  %223 = vmatprep.mubr.bf16.mxu0 0
  %224 = vmatmul.mubr.bf16.gmra.mxu0 %v120
  %v225 = vpop.f32.mrf.mxu0
  %v226 = vadd.f32 0.0, %v225
  %v227 = vpop.f32.mrf.mxu0
  %v228 = vpop.f32.mrf.mxu0
  %v229 = vadd.f32 0.0, %v228
  %v230 = vpop.f32.mrf.mxu0
  %231 = vmatprep.mubr.bf16.mxu0 0
  %232 = vmatmul.mubr.bf16.gmra.mxu0 %v121
  %v233 = vpop.f32.mrf.mxu0
  %v234 = vadd.f32 0.0, %v233
  %v235 = vpop.f32.mrf.mxu0
  %v236 = vpop.f32.mrf.mxu0
  %v237 = vadd.f32 0.0, %v236
  %v238 = vpop.f32.mrf.mxu0
  %239 = vmatprep.mubr.bf16.mxu0 0
  %240 = vmatmul.mubr.bf16.gmra.mxu0 %v122
  %v241 = vpop.f32.mrf.mxu0
  %v242 = vadd.f32 0.0, %v241
  %v243 = vpop.f32.mrf.mxu0
  %v244 = vpop.f32.mrf.mxu0
  %v245 = vadd.f32 0.0, %v244
  %v246 = vpop.f32.mrf.mxu0
  %247 = vmatprep.mubr.bf16.mxu0 0
  %248 = vmatmul.mubr.bf16.gmra.mxu0 %v123
  %v249 = vpop.f32.mrf.mxu0
  %v250 = vadd.f32 0.0, %v249
  %v251 = vpop.f32.mrf.mxu0
  %v252 = vpop.f32.mrf.mxu0
  %v253 = vadd.f32 0.0, %v252
  %v254 = vpop.f32.mrf.mxu0
  %255 = vmatprep.mubr.bf16.mxu0 0
  %256 = vmatmul.mubr.bf16.gmra.mxu0 %v124
  %v257 = vpop.f32.mrf.mxu0
  %v258 = vadd.f32 0.0, %v257
  %v259 = vpop.f32.mrf.mxu0
  %v260 = vpop.f32.mrf.mxu0
  %v261 = vadd.f32 0.0, %v260
  %v262 = vpop.f32.mrf.mxu0
  %263 = vmatprep.mubr.bf16.mxu0 0
  %264 = vmatmul.mubr.bf16.gmra.mxu0 %v125
  %v265 = vpop.f32.mrf.mxu0
  %v266 = vadd.f32 0.0, %v265
  %v267 = vpop.f32.mrf.mxu0
  %v268 = vpop.f32.mrf.mxu0
  %v269 = vadd.f32 0.0, %v268
  %v270 = vpop.f32.mrf.mxu0
  %271 = vmatprep.mubr.bf16.mxu0 0
  %272 = vmatmul.mubr.bf16.gmra.mxu0 %v126
  %v273 = vpop.f32.mrf.mxu0
  %v274 = vadd.f32 0.0, %v273
  %v275 = vpop.f32.mrf.mxu0
  %v276 = vpop.f32.mrf.mxu0
  %v277 = vadd.f32 0.0, %v276
  %v278 = vpop.f32.mrf.mxu0
  %279 = vdwg.mxu0
  %281 = vset.pattern.permute.xlu0 0
  %282 = vperm.xlu0 %281, %v39
  %v283 = vpop.permute.xlu0 %282
  %286 = vset.pattern.permute.xlu0 0
  %287 = vperm.xlu0 %286, %v40
  %v288 = vpop.permute.xlu0 %287
  %291 = vset.pattern.permute.xlu0 0
  %292 = vperm.xlu0 %291, %v41
  %v293 = vpop.permute.xlu0 %292
  %296 = vset.pattern.permute.xlu0 0
  %297 = vperm.xlu0 %296, %v42
  %v298 = vpop.permute.xlu0 %297
  %301 = vset.pattern.permute.xlu0 0
  %302 = vperm.xlu0 %301, %v43
  %v303 = vpop.permute.xlu0 %302
  %306 = vset.pattern.permute.xlu0 0
  %307 = vperm.xlu0 %306, %v44
  %v308 = vpop.permute.xlu0 %307
  %311 = vset.pattern.permute.xlu0 0
  %312 = vperm.xlu0 %311, %v45
  %v313 = vpop.permute.xlu0 %312
  %316 = vset.pattern.permute.xlu0 0
  %317 = vperm.xlu0 %316, %v46
  %v318 = vpop.permute.xlu0 %317
  %321 = vset.pattern.permute.xlu0 0
  %322 = vperm.xlu0 %321, %v47
  %v323 = vpop.permute.xlu0 %322
  %326 = vset.pattern.permute.xlu0 0
  %327 = vperm.xlu0 %326, %v48
  %v328 = vpop.permute.xlu0 %327
  %331 = vset.pattern.permute.xlu0 0
  %332 = vperm.xlu0 %331, %v49
  %v333 = vpop.permute.xlu0 %332
  %336 = vset.pattern.permute.xlu0 0
  %337 = vperm.xlu0 %336, %v50
  %v338 = vpop.permute.xlu0 %337
  %341 = vset.pattern.permute.xlu0 0
  %342 = vperm.xlu0 %341, %v51
  %v343 = vpop.permute.xlu0 %342
  %346 = vset.pattern.permute.xlu0 0
  %347 = vperm.xlu0 %346, %v52
  %v348 = vpop.permute.xlu0 %347
  %351 = vset.pattern.permute.xlu0 0
  %352 = vperm.xlu0 %351, %v53
  %v353 = vpop.permute.xlu0 %352
  %356 = vset.pattern.permute.xlu0 0
  %357 = vperm.xlu0 %356, %v54
  %v358 = vpop.permute.xlu0 %357
  %v360 = vmul.f32 %v218, %v283
  %v361 = vmul.f32 %v221, %v288
  %v362 = vmul.f32 %v226, %v293
  %v363 = vmul.f32 %v229, %v298
  %v364 = vmul.f32 %v234, %v303
  %v365 = vmul.f32 %v237, %v308
  %v366 = vmul.f32 %v242, %v313
  %v367 = vmul.f32 %v245, %v318
  %v368 = vmul.f32 %v250, %v323
  %v369 = vmul.f32 %v253, %v328
  %v370 = vmul.f32 %v258, %v333
  %v371 = vmul.f32 %v261, %v338
  %v372 = vmul.f32 %v266, %v343
  %v373 = vmul.f32 %v269, %v348
  %v374 = vmul.f32 %v274, %v353
  %v375 = vmul.f32 %v277, %v358
  %v376 = vpack.c.bf16 %v361, %v360
  %v377 = vpack.c.bf16 %v363, %v362
  %v378 = vpack.c.bf16 %v365, %v364
  %v379 = vpack.c.bf16 %v367, %v366
  %v380 = vpack.c.bf16 %v369, %v368
  %v381 = vpack.c.bf16 %v371, %v370
  %v382 = vpack.c.bf16 %v373, %v372
  %v383 = vpack.c.bf16 %v375, %v374
  %384 = vmatprep.subr.bf16.mxu0 0
  %385 = vmatpush1.bf16.msra.mxu0 %v383
  %386 = vmatprep.subr.bf16.mxu0 0
  %387 = vmatpush1.bf16.msra.mxu0 %v382
  %388 = vmatprep.subr.bf16.mxu0 0
  %389 = vmatpush1.bf16.msra.mxu0 %v381
  %390 = vmatprep.subr.bf16.mxu0 0
  %391 = vmatpush1.bf16.msra.mxu0 %v380
  %392 = vmatprep.subr.bf16.mxu0 0
  %393 = vmatpush1.bf16.msra.mxu0 %v379
  %394 = vmatprep.subr.bf16.mxu0 0
  %395 = vmatpush1.bf16.msra.mxu0 %v378
  %396 = vmatprep.subr.bf16.mxu0 0
  %397 = vmatpush1.bf16.msra.mxu0 %v377
  %398 = vmatprep.subr.bf16.mxu0 0
  %399 = vmatpush1.bf16.msra.mxu0 %v376
  %400 = vmatprep.subr.bf16.mxu0 0
  %401 = vmatpush2.bf16.msra.mxu0 0
  %402 = vmatprep.subr.bf16.mxu0 0
  %403 = vmatpush2.bf16.msra.mxu0 0
  %404 = vmatprep.subr.bf16.mxu0 0
  %405 = vmatpush2.bf16.msra.mxu0 0
  %406 = vmatprep.subr.bf16.mxu0 0
  %407 = vmatpush2.bf16.msra.mxu0 0
  %408 = vmatprep.subr.bf16.mxu0 0
  %409 = vmatpush2.bf16.msra.mxu0 0
  %410 = vmatprep.subr.bf16.mxu0 0
  %411 = vmatpush2.bf16.msra.mxu0 0
  %412 = vmatprep.subr.bf16.mxu0 0
  %413 = vmatpush2.bf16.msra.mxu0 0
  %414 = vmatprep.subr.bf16.mxu0 0
  %415 = vmatpush2.bf16.msra.mxu0 0
  %416 = vmatprep.mubr.bf16.mxu0 0
  %417 = vmatmul.mubr.bf16.gmra.mxu0 %v31
  %v418 = vpop.f32.mrf.mxu0
  %v419 = vadd.f32 0.0, %v418
  %v420 = vpop.f32.mrf.mxu0
  %v421 = vpop.f32.mrf.mxu0
  %v422 = vadd.f32 0.0, %v421
  %v423 = vpop.f32.mrf.mxu0
  %424 = vmatprep.mubr.bf16.mxu0 0
  %425 = vmatmul.mubr.bf16.gmra.mxu0 %v32
  %v426 = vpop.f32.mrf.mxu0
  %v427 = vadd.f32 0.0, %v426
  %v428 = vpop.f32.mrf.mxu0
  %v429 = vpop.f32.mrf.mxu0
  %v430 = vadd.f32 0.0, %v429
  %v431 = vpop.f32.mrf.mxu0
  %432 = vmatprep.mubr.bf16.mxu0 0
  %433 = vmatmul.mubr.bf16.gmra.mxu0 %v33
  %v434 = vpop.f32.mrf.mxu0
  %v435 = vadd.f32 0.0, %v434
  %v436 = vpop.f32.mrf.mxu0
  %v437 = vpop.f32.mrf.mxu0
  %v438 = vadd.f32 0.0, %v437
  %v439 = vpop.f32.mrf.mxu0
  %440 = vmatprep.mubr.bf16.mxu0 0
  %441 = vmatmul.mubr.bf16.gmra.mxu0 %v34
  %v442 = vpop.f32.mrf.mxu0
  %v443 = vadd.f32 0.0, %v442
  %v444 = vpop.f32.mrf.mxu0
  %v445 = vpop.f32.mrf.mxu0
  %v446 = vadd.f32 0.0, %v445
  %v447 = vpop.f32.mrf.mxu0
  %448 = vmatprep.mubr.bf16.mxu0 0
  %449 = vmatmul.mubr.bf16.gmra.mxu0 %v35
  %v450 = vpop.f32.mrf.mxu0
  %v451 = vadd.f32 0.0, %v450
  %v452 = vpop.f32.mrf.mxu0
  %v453 = vpop.f32.mrf.mxu0
  %v454 = vadd.f32 0.0, %v453
  %v455 = vpop.f32.mrf.mxu0
  %456 = vmatprep.mubr.bf16.mxu0 0
  %457 = vmatmul.mubr.bf16.gmra.mxu0 %v36
  %v458 = vpop.f32.mrf.mxu0
  %v459 = vadd.f32 0.0, %v458
  %v460 = vpop.f32.mrf.mxu0
  %v461 = vpop.f32.mrf.mxu0
  %v462 = vadd.f32 0.0, %v461
  %v463 = vpop.f32.mrf.mxu0
  %464 = vmatprep.mubr.bf16.mxu0 0
  %465 = vmatmul.mubr.bf16.gmra.mxu0 %v37
  %v466 = vpop.f32.mrf.mxu0
  %v467 = vadd.f32 0.0, %v466
  %v468 = vpop.f32.mrf.mxu0
  %v469 = vpop.f32.mrf.mxu0
  %v470 = vadd.f32 0.0, %v469
  %v471 = vpop.f32.mrf.mxu0
  %472 = vmatprep.mubr.bf16.mxu0 0
  %473 = vmatmul.mubr.bf16.gmra.mxu0 %v38
  %v474 = vpop.f32.mrf.mxu0
  %v475 = vadd.f32 0.0, %v474
  %v476 = vpop.f32.mrf.mxu0
  %v477 = vpop.f32.mrf.mxu0
  %v478 = vadd.f32 0.0, %v477
  %v479 = vpop.f32.mrf.mxu0
  %480 = vdwg.mxu0
  %v481 = vmul.f32 %v283, %v419
  %v482 = vmul.f32 %v288, %v422
  %v483 = vmul.f32 %v293, %v427
  %v484 = vmul.f32 %v298, %v430
  %v485 = vmul.f32 %v303, %v435
  %v486 = vmul.f32 %v308, %v438
  %v487 = vmul.f32 %v313, %v443
  %v488 = vmul.f32 %v318, %v446
  %v489 = vmul.f32 %v323, %v451
  %v490 = vmul.f32 %v328, %v454
  %v491 = vmul.f32 %v333, %v459
  %v492 = vmul.f32 %v338, %v462
  %v493 = vmul.f32 %v343, %v467
  %v494 = vmul.f32 %v348, %v470
  %v495 = vmul.f32 %v353, %v475
  %v496 = vmul.f32 %v358, %v478
  %v497 = vld [vmem:[%s3] sm:$0x1]
  %v499 = vlaneseq
  %v500 = vshrl.u32 %v499, 7
  %v501 = vsub.s32 0, %v500
  %v502 = vrot.slane %v497, %v501
  %v504 = vadd.f32 %v481, %v502
  %v505 = vadd.f32 %v482, %v502
  %v506 = vadd.f32 %v483, %v502
  %v507 = vadd.f32 %v484, %v502
  %v508 = vadd.f32 %v485, %v502
  %v509 = vadd.f32 %v486, %v502
  %v510 = vadd.f32 %v487, %v502
  %v511 = vadd.f32 %v488, %v502
  %v512 = vadd.f32 %v489, %v502
  %v513 = vadd.f32 %v490, %v502
  %v514 = vadd.f32 %v491, %v502
  %v515 = vadd.f32 %v492, %v502
  %v516 = vadd.f32 %v493, %v502
  %v517 = vadd.f32 %v494, %v502
  %v518 = vadd.f32 %v495, %v502
  %v519 = vadd.f32 %v496, %v502
  %v520 = vmax.f32 %v504, 0.0
  %v521 = vmax.f32 %v505, 0.0
  %v522 = vmax.f32 %v506, 0.0
  %v523 = vmax.f32 %v507, 0.0
  %v524 = vmax.f32 %v508, 0.0
  %v525 = vmax.f32 %v509, 0.0
  %v526 = vmax.f32 %v510, 0.0
  %v527 = vmax.f32 %v511, 0.0
  %v528 = vmax.f32 %v512, 0.0
  %v529 = vmax.f32 %v513, 0.0
  %v530 = vmax.f32 %v514, 0.0
  %v531 = vmax.f32 %v515, 0.0
  %v532 = vmax.f32 %v516, 0.0
  %v533 = vmax.f32 %v517, 0.0
  %v534 = vmax.f32 %v518, 0.0
  %v535 = vmax.f32 %v519, 0.0
  %v536 = vpack.c.bf16 %v521, %v520
  %v537 = vpack.c.bf16 %v523, %v522
  %v538 = vpack.c.bf16 %v525, %v524
  %v539 = vpack.c.bf16 %v527, %v526
  %v540 = vpack.c.bf16 %v529, %v528
  %v541 = vpack.c.bf16 %v531, %v530
  %v542 = vpack.c.bf16 %v533, %v532
  %v543 = vpack.c.bf16 %v535, %v534
  %v544 = vld [vmem:[%s4] sm:$0xf]
  %v545 = vld [vmem:[%s4 + $0x4] sm:$0xf]
  %v546 = vld [vmem:[%s4 + $0x8] sm:$0xf]
  %v547 = vld [vmem:[%s4 + $0xc] sm:$0xf]
  %v548 = vld [vmem:[%s4 + $0x10] sm:$0xf]
  %v549 = vld [vmem:[%s4 + $0x14] sm:$0xf]
  %v550 = vld [vmem:[%s4 + $0x18] sm:$0xf]
  %v551 = vld [vmem:[%s4 + $0x1c] sm:$0xf]
  %v552 = vld [vmem:[%s4 + $0x20] sm:$0xf]
  %v553 = vld [vmem:[%s4 + $0x24] sm:$0xf]
  %v554 = vld [vmem:[%s4 + $0x28] sm:$0xf]
  %v555 = vld [vmem:[%s4 + $0x2c] sm:$0xf]
  %v556 = vld [vmem:[%s4 + $0x30] sm:$0xf]
  %v557 = vld [vmem:[%s4 + $0x34] sm:$0xf]
  %v558 = vld [vmem:[%s4 + $0x38] sm:$0xf]
  %v559 = vld [vmem:[%s4 + $0x3c] sm:$0xf]
  %v576 = vunpack.c.l.b16 %v544
  %v577 = vunpack.c.l.b16 %v545
  %v578 = vunpack.c.l.b16 %v546
  %v579 = vunpack.c.l.b16 %v547
  %v580 = vunpack.c.l.b16 %v548
  %v581 = vunpack.c.l.b16 %v549
  %v582 = vunpack.c.l.b16 %v550
  %v583 = vunpack.c.l.b16 %v551
  %v584 = vunpack.c.l.b16 %v552
  %v585 = vunpack.c.l.b16 %v553
  %v586 = vunpack.c.l.b16 %v554
  %v587 = vunpack.c.l.b16 %v555
  %v588 = vunpack.c.l.b16 %v556
  %v589 = vunpack.c.l.b16 %v557
  %v590 = vunpack.c.l.b16 %v558
  %v591 = vunpack.c.l.b16 %v559
  %v592 = vpack.c.b16 %v577, %v576
  %v593 = vpack.c.b16 %v579, %v578
  %v594 = vpack.c.b16 %v581, %v580
  %v595 = vpack.c.b16 %v583, %v582
  %v596 = vpack.c.b16 %v585, %v584
  %v597 = vpack.c.b16 %v587, %v586
  %v598 = vpack.c.b16 %v589, %v588
  %v599 = vpack.c.b16 %v591, %v590
  %608 = vmatprep.subr.bf16.mxu0 0
  %609 = vmatpush1.bf16.msra.mxu0 %v599
  %610 = vmatprep.subr.bf16.mxu0 0
  %611 = vmatpush1.bf16.msra.mxu0 %v598
  %612 = vmatprep.subr.bf16.mxu0 0
  %613 = vmatpush1.bf16.msra.mxu0 %v597
  %614 = vmatprep.subr.bf16.mxu0 0
  %615 = vmatpush1.bf16.msra.mxu0 %v596
  %616 = vmatprep.subr.bf16.mxu0 0
  %617 = vmatpush1.bf16.msra.mxu0 %v595
  %618 = vmatprep.subr.bf16.mxu0 0
  %619 = vmatpush1.bf16.msra.mxu0 %v594
  %620 = vmatprep.subr.bf16.mxu0 0
  %621 = vmatpush1.bf16.msra.mxu0 %v593
  %622 = vmatprep.subr.bf16.mxu0 0
  %623 = vmatpush1.bf16.msra.mxu0 %v592
  %624 = vmatprep.subr.bf16.mxu0 0
  %625 = vmatpush2.bf16.msra.mxu0 0
  %626 = vmatprep.subr.bf16.mxu0 0
  %627 = vmatpush2.bf16.msra.mxu0 0
  %628 = vmatprep.subr.bf16.mxu0 0
  %629 = vmatpush2.bf16.msra.mxu0 0
  %630 = vmatprep.subr.bf16.mxu0 0
  %631 = vmatpush2.bf16.msra.mxu0 0
  %632 = vmatprep.subr.bf16.mxu0 0
  %633 = vmatpush2.bf16.msra.mxu0 0
  %634 = vmatprep.subr.bf16.mxu0 0
  %635 = vmatpush2.bf16.msra.mxu0 0
  %636 = vmatprep.subr.bf16.mxu0 0
  %637 = vmatpush2.bf16.msra.mxu0 0
  %638 = vmatprep.subr.bf16.mxu0 0
  %639 = vmatpush2.bf16.msra.mxu0 0
  %640 = vmatprep.mubr.bf16.mxu0 0
  %641 = vmatmul.mubr.bf16.gmra.mxu0 %v536
  %v642 = vpop.f32.mrf.mxu0
  %v643 = vadd.f32 0.0, %v642
  %v644 = vpop.f32.mrf.mxu0
  %v645 = vpop.f32.mrf.mxu0
  %v646 = vadd.f32 0.0, %v645
  %v647 = vpop.f32.mrf.mxu0
  %648 = vmatprep.mubr.bf16.mxu0 0
  %649 = vmatmul.mubr.bf16.gmra.mxu0 %v537
  %v650 = vpop.f32.mrf.mxu0
  %v651 = vadd.f32 0.0, %v650
  %v652 = vpop.f32.mrf.mxu0
  %v653 = vpop.f32.mrf.mxu0
  %v654 = vadd.f32 0.0, %v653
  %v655 = vpop.f32.mrf.mxu0
  %656 = vmatprep.mubr.bf16.mxu0 0
  %657 = vmatmul.mubr.bf16.gmra.mxu0 %v538
  %v658 = vpop.f32.mrf.mxu0
  %v659 = vadd.f32 0.0, %v658
  %v660 = vpop.f32.mrf.mxu0
  %v661 = vpop.f32.mrf.mxu0
  %v662 = vadd.f32 0.0, %v661
  %v663 = vpop.f32.mrf.mxu0
  %664 = vmatprep.mubr.bf16.mxu0 0
  %665 = vmatmul.mubr.bf16.gmra.mxu0 %v539
  %v666 = vpop.f32.mrf.mxu0
  %v667 = vadd.f32 0.0, %v666
  %v668 = vpop.f32.mrf.mxu0
  %v669 = vpop.f32.mrf.mxu0
  %v670 = vadd.f32 0.0, %v669
  %v671 = vpop.f32.mrf.mxu0
  %672 = vmatprep.mubr.bf16.mxu0 0
  %673 = vmatmul.mubr.bf16.gmra.mxu0 %v540
  %v674 = vpop.f32.mrf.mxu0
  %v675 = vadd.f32 0.0, %v674
  %v676 = vpop.f32.mrf.mxu0
  %v677 = vpop.f32.mrf.mxu0
  %v678 = vadd.f32 0.0, %v677
  %v679 = vpop.f32.mrf.mxu0
  %680 = vmatprep.mubr.bf16.mxu0 0
  %681 = vmatmul.mubr.bf16.gmra.mxu0 %v541
  %v682 = vpop.f32.mrf.mxu0
  %v683 = vadd.f32 0.0, %v682
  %v684 = vpop.f32.mrf.mxu0
  %v685 = vpop.f32.mrf.mxu0
  %v686 = vadd.f32 0.0, %v685
  %v687 = vpop.f32.mrf.mxu0
  %688 = vmatprep.mubr.bf16.mxu0 0
  %689 = vmatmul.mubr.bf16.gmra.mxu0 %v542
  %v690 = vpop.f32.mrf.mxu0
  %v691 = vadd.f32 0.0, %v690
  %v692 = vpop.f32.mrf.mxu0
  %v693 = vpop.f32.mrf.mxu0
  %v694 = vadd.f32 0.0, %v693
  %v695 = vpop.f32.mrf.mxu0
  %696 = vmatprep.mubr.bf16.mxu0 0
  %697 = vmatmul.mubr.bf16.gmra.mxu0 %v543
  %v698 = vpop.f32.mrf.mxu0
  %v699 = vadd.f32 0.0, %v698
  %v700 = vpop.f32.mrf.mxu0
  %v701 = vpop.f32.mrf.mxu0
  %v702 = vadd.f32 0.0, %v701
  %v703 = vpop.f32.mrf.mxu0
  %704 = vdwg.mxu0
  %v705 = vmul.f32 %v643, %v283
  %v706 = vmul.f32 %v646, %v288
  %v707 = vmul.f32 %v651, %v293
  %v708 = vmul.f32 %v654, %v298
  %v709 = vmul.f32 %v659, %v303
  %v710 = vmul.f32 %v662, %v308
  %v711 = vmul.f32 %v667, %v313
  %v712 = vmul.f32 %v670, %v318
  %v713 = vmul.f32 %v675, %v323
  %v714 = vmul.f32 %v678, %v328
  %v715 = vmul.f32 %v683, %v333
  %v716 = vmul.f32 %v686, %v338
  %v717 = vmul.f32 %v691, %v343
  %v718 = vmul.f32 %v694, %v348
  %v719 = vmul.f32 %v699, %v353
  %v720 = vmul.f32 %v702, %v358
  %v721 = vpack.c.bf16 %v706, %v705
  %v722 = vpack.c.bf16 %v708, %v707
  %v723 = vpack.c.bf16 %v710, %v709
  %v724 = vpack.c.bf16 %v712, %v711
  %v725 = vpack.c.bf16 %v714, %v713
  %v726 = vpack.c.bf16 %v716, %v715
  %v727 = vpack.c.bf16 %v718, %v717
  %v728 = vpack.c.bf16 %v720, %v719
  %729 = vmatprep.subr.bf16.mxu0 0
  %730 = vmatpush1.bf16.msra.mxu0 %v728
  %731 = vmatprep.subr.bf16.mxu0 0
  %732 = vmatpush1.bf16.msra.mxu0 %v727
  %733 = vmatprep.subr.bf16.mxu0 0
  %734 = vmatpush1.bf16.msra.mxu0 %v726
  %735 = vmatprep.subr.bf16.mxu0 0
  %736 = vmatpush1.bf16.msra.mxu0 %v725
  %737 = vmatprep.subr.bf16.mxu0 0
  %738 = vmatpush1.bf16.msra.mxu0 %v724
  %739 = vmatprep.subr.bf16.mxu0 0
  %740 = vmatpush1.bf16.msra.mxu0 %v723
  %741 = vmatprep.subr.bf16.mxu0 0
  %742 = vmatpush1.bf16.msra.mxu0 %v722
  %743 = vmatprep.subr.bf16.mxu0 0
  %744 = vmatpush1.bf16.msra.mxu0 %v721
  %745 = vmatprep.subr.bf16.mxu0 0
  %746 = vmatpush2.bf16.msra.mxu0 0
  %747 = vmatprep.subr.bf16.mxu0 0
  %748 = vmatpush2.bf16.msra.mxu0 0
  %749 = vmatprep.subr.bf16.mxu0 0
  %750 = vmatpush2.bf16.msra.mxu0 0
  %751 = vmatprep.subr.bf16.mxu0 0
  %752 = vmatpush2.bf16.msra.mxu0 0
  %753 = vmatprep.subr.bf16.mxu0 0
  %754 = vmatpush2.bf16.msra.mxu0 0
  %755 = vmatprep.subr.bf16.mxu0 0
  %756 = vmatpush2.bf16.msra.mxu0 0
  %757 = vmatprep.subr.bf16.mxu0 0
  %758 = vmatpush2.bf16.msra.mxu0 0
  %759 = vmatprep.subr.bf16.mxu0 0
  %760 = vmatpush2.bf16.msra.mxu0 0
  %761 = vmatprep.mubr.bf16.mxu0 0
  %762 = vmatmul.mubr.bf16.gmra.mxu0 %v31
  %v763 = vpop.f32.mrf.mxu0
  %v764 = vadd.f32 0.0, %v763
  %v765 = vpop.f32.mrf.mxu0
  %v766 = vpop.f32.mrf.mxu0
  %v767 = vadd.f32 0.0, %v766
  %v768 = vpop.f32.mrf.mxu0
  %769 = vmatprep.mubr.bf16.mxu0 0
  %770 = vmatmul.mubr.bf16.gmra.mxu0 %v32
  %v771 = vpop.f32.mrf.mxu0
  %v772 = vadd.f32 0.0, %v771
  %v773 = vpop.f32.mrf.mxu0
  %v774 = vpop.f32.mrf.mxu0
  %v775 = vadd.f32 0.0, %v774
  %v776 = vpop.f32.mrf.mxu0
  %777 = vmatprep.mubr.bf16.mxu0 0
  %778 = vmatmul.mubr.bf16.gmra.mxu0 %v33
  %v779 = vpop.f32.mrf.mxu0
  %v780 = vadd.f32 0.0, %v779
  %v781 = vpop.f32.mrf.mxu0
  %v782 = vpop.f32.mrf.mxu0
  %v783 = vadd.f32 0.0, %v782
  %v784 = vpop.f32.mrf.mxu0
  %785 = vmatprep.mubr.bf16.mxu0 0
  %786 = vmatmul.mubr.bf16.gmra.mxu0 %v34
  %v787 = vpop.f32.mrf.mxu0
  %v788 = vadd.f32 0.0, %v787
  %v789 = vpop.f32.mrf.mxu0
  %v790 = vpop.f32.mrf.mxu0
  %v791 = vadd.f32 0.0, %v790
  %v792 = vpop.f32.mrf.mxu0
  %793 = vmatprep.mubr.bf16.mxu0 0
  %794 = vmatmul.mubr.bf16.gmra.mxu0 %v35
  %v795 = vpop.f32.mrf.mxu0
  %v796 = vadd.f32 0.0, %v795
  %v797 = vpop.f32.mrf.mxu0
  %v798 = vpop.f32.mrf.mxu0
  %v799 = vadd.f32 0.0, %v798
  %v800 = vpop.f32.mrf.mxu0
  %801 = vmatprep.mubr.bf16.mxu0 0
  %802 = vmatmul.mubr.bf16.gmra.mxu0 %v36
  %v803 = vpop.f32.mrf.mxu0
  %v804 = vadd.f32 0.0, %v803
  %v805 = vpop.f32.mrf.mxu0
  %v806 = vpop.f32.mrf.mxu0
  %v807 = vadd.f32 0.0, %v806
  %v808 = vpop.f32.mrf.mxu0
  %809 = vmatprep.mubr.bf16.mxu0 0
  %810 = vmatmul.mubr.bf16.gmra.mxu0 %v37
  %v811 = vpop.f32.mrf.mxu0
  %v812 = vadd.f32 0.0, %v811
  %v813 = vpop.f32.mrf.mxu0
  %v814 = vpop.f32.mrf.mxu0
  %v815 = vadd.f32 0.0, %v814
  %v816 = vpop.f32.mrf.mxu0
  %817 = vmatprep.mubr.bf16.mxu0 0
  %818 = vmatmul.mubr.bf16.gmra.mxu0 %v38
  %v819 = vpop.f32.mrf.mxu0
  %v820 = vadd.f32 0.0, %v819
  %v821 = vpop.f32.mrf.mxu0
  %v822 = vpop.f32.mrf.mxu0
  %v823 = vadd.f32 0.0, %v822
  %v824 = vpop.f32.mrf.mxu0
  %825 = vdwg.mxu0
  %v826 = vmul.f32 %v283, %v764
  %v827 = vmul.f32 %v288, %v767
  %v828 = vmul.f32 %v293, %v772
  %v829 = vmul.f32 %v298, %v775
  %v830 = vmul.f32 %v303, %v780
  %v831 = vmul.f32 %v308, %v783
  %v832 = vmul.f32 %v313, %v788
  %v833 = vmul.f32 %v318, %v791
  %v834 = vmul.f32 %v323, %v796
  %v835 = vmul.f32 %v328, %v799
  %v836 = vmul.f32 %v333, %v804
  %v837 = vmul.f32 %v338, %v807
  %v838 = vmul.f32 %v343, %v812
  %v839 = vmul.f32 %v348, %v815
  %v840 = vmul.f32 %v353, %v820
  %v841 = vmul.f32 %v358, %v823
  %v842 = vld [vmem:[%s5] sm:$0x1]
  %v844 = vlaneseq
  %v845 = vshrl.u32 %v844, 7
  %v846 = vsub.s32 0, %v845
  %v847 = vrot.slane %v842, %v846
  %v849 = vadd.f32 %v826, %v847
  %v850 = vadd.f32 %v827, %v847
  %v851 = vadd.f32 %v828, %v847
  %v852 = vadd.f32 %v829, %v847
  %v853 = vadd.f32 %v830, %v847
  %v854 = vadd.f32 %v831, %v847
  %v855 = vadd.f32 %v832, %v847
  %v856 = vadd.f32 %v833, %v847
  %v857 = vadd.f32 %v834, %v847
  %v858 = vadd.f32 %v835, %v847
  %v859 = vadd.f32 %v836, %v847
  %v860 = vadd.f32 %v837, %v847
  %v861 = vadd.f32 %v838, %v847
  %v862 = vadd.f32 %v839, %v847
  %v863 = vadd.f32 %v840, %v847
  %v864 = vadd.f32 %v841, %v847
  %v865 = vpack.c.bf16 %v850, %v849
  %v866 = vpack.c.bf16 %v852, %v851
  %v867 = vpack.c.bf16 %v854, %v853
  %v868 = vpack.c.bf16 %v856, %v855
  %v869 = vpack.c.bf16 %v858, %v857
  %v870 = vpack.c.bf16 %v860, %v859
  %v871 = vpack.c.bf16 %v862, %v861
  %v872 = vpack.c.bf16 %v864, %v863
  %v881 = vunpack.c.l.b16 %v865
  %v882 = vunpack.c.h.b16 %v865
  %v883 = vunpack.c.l.b16 %v866
  %v884 = vunpack.c.h.b16 %v866
  %v885 = vunpack.c.l.b16 %v867
  %v886 = vunpack.c.h.b16 %v867
  %v887 = vunpack.c.l.b16 %v868
  %v888 = vunpack.c.h.b16 %v868
  %v889 = vunpack.c.l.b16 %v869
  %v890 = vunpack.c.h.b16 %v869
  %v891 = vunpack.c.l.b16 %v870
  %v892 = vunpack.c.h.b16 %v870
  %v893 = vunpack.c.l.b16 %v871
  %v894 = vunpack.c.h.b16 %v871
  %v895 = vunpack.c.l.b16 %v872
  %v896 = vunpack.c.h.b16 %v872
  %v897 = vpack.c.b16 %v881, %v881
  %v898 = vpack.c.b16 %v882, %v882
  %v899 = vpack.c.b16 %v883, %v883
  %v900 = vpack.c.b16 %v884, %v884
  %v901 = vpack.c.b16 %v885, %v885
  %v902 = vpack.c.b16 %v886, %v886
  %v903 = vpack.c.b16 %v887, %v887
  %v904 = vpack.c.b16 %v888, %v888
  %v905 = vpack.c.b16 %v889, %v889
  %v906 = vpack.c.b16 %v890, %v890
  %v907 = vpack.c.b16 %v891, %v891
  %v908 = vpack.c.b16 %v892, %v892
  %v909 = vpack.c.b16 %v893, %v893
  %v910 = vpack.c.b16 %v894, %v894
  %v911 = vpack.c.b16 %v895, %v895
  %v912 = vpack.c.b16 %v896, %v896
  %929 = vst [vmem:[%s7] sm:$0xf] %v897
  %930 = vst [vmem:[%s7 + $0x4] sm:$0xf] %v898
  %931 = vst [vmem:[%s7 + $0x8] sm:$0xf] %v899
  %932 = vst [vmem:[%s7 + $0xc] sm:$0xf] %v900
  %933 = vst [vmem:[%s7 + $0x10] sm:$0xf] %v901
  %934 = vst [vmem:[%s7 + $0x14] sm:$0xf] %v902
  %935 = vst [vmem:[%s7 + $0x18] sm:$0xf] %v903
  %936 = vst [vmem:[%s7 + $0x1c] sm:$0xf] %v904
  %937 = vst [vmem:[%s7 + $0x20] sm:$0xf] %v905
  %938 = vst [vmem:[%s7 + $0x24] sm:$0xf] %v906
  %939 = vst [vmem:[%s7 + $0x28] sm:$0xf] %v907
  %940 = vst [vmem:[%s7 + $0x2c] sm:$0xf] %v908
  %941 = vst [vmem:[%s7 + $0x30] sm:$0xf] %v909
  %942 = vst [vmem:[%s7 + $0x34] sm:$0xf] %v910
  %943 = vst [vmem:[%s7 + $0x38] sm:$0xf] %v911
  %944 = vst [vmem:[%s7 + $0x3c] sm:$0xf] %v912
  // Predicated region
  $region30: #{gcn_forward.1} parent=0 // pred_check
    _
  $region31: #{gcn_forward.1} parent=0 // pred_check_branch
    %946 = sbr.rel (0) target = $region33
  $region32: #{gcn_forward.1} parent=0 // pred_region
    _
  $region33: #{gcn_forward.1} parent=0 // pred_fallthru
    _
  // Predicated region
  $region34: #{gcn_forward.1} parent=0 // pred_check
    _
  $region35: #{gcn_forward.1} parent=0 // pred_check_branch
    %948 = sbr.rel (0) target = $region37
  $region36: #{gcn_forward.1} parent=0 // pred_region
    _
  $region37: #{gcn_forward.1} parent=0 // pred_fallthru
    _

</llo_original>
